<compile_context>
chip_gen: v7x
topology: tpu7x:2x2x1
jax: 0.10.0
libtpu: 0.0.40
codegen_flags: <defaults>
</compile_context>

<pallas_src>
import jax
import jax.numpy as jnp
from jax.experimental import pallas as pl
from jax.experimental.pallas import tpu as pltpu


def _round_up(x: int, m: int) -> int:
    return ((x + m - 1) // m) * m


# ----------------------------------------------------------------------------
# Path A: small vocab — table VMEM-resident, one-hot MXU gather per token block
# ----------------------------------------------------------------------------
def _make_resident_kernel(token_block: int, v_pad: int):
    def kernel(idx_ref, tbl_ref, out_ref):
        # idx_ref: (T, 1) int32 token ids for this block (VMEM)
        # tbl_ref: (V_pad, E_pad) table, resident across the whole grid
        # out_ref: (T, E_pad) normalized embeddings
        idx = idx_ref[...]                                          # (T, 1)
        iota = jax.lax.broadcasted_iota(jnp.int32, (token_block, v_pad), 1)
        onehot = (iota == idx).astype(tbl_ref.dtype)                # exact 0/1
        # Gather = one-hot matmul on the MXU (exact); f32 accumulation.
        emb = jnp.dot(onehot, tbl_ref[...],
                      preferred_element_type=jnp.float32)           # (T, E_pad)
        inv = jax.lax.rsqrt(jnp.sum(emb * emb, axis=-1, keepdims=True))
        out_ref[...] = (emb * inv).astype(out_ref.dtype)

    return kernel


# ----------------------------------------------------------------------------
# Path B: large vocab — table in HBM, manual batched row-gather DMA
# ----------------------------------------------------------------------------
def _make_gather_kernel(token_block: int):
    T = token_block

    def kernel(ids_ref, tbl_hbm, out_ref, gbuf, sem):
        # ids_ref: (N_pad,) int32 token ids in SMEM (scalar prefetch)
        # tbl_hbm: (V, E_pad) embedding table left in HBM (pl.ANY)
        # out_ref: (T, E_pad) normalized embeddings (VMEM block)
        # gbuf   : (T, E_pad) VMEM gather buffer
        # sem    : (1,) DMA semaphore (all row copies signal the same sem)
        base = pl.program_id(0) * T

        # Issue all T row DMAs back-to-back; they stay outstanding together so
        # per-descriptor latency is hidden by the batch.
        # TODO(synk): double-buffer across token blocks (prefetch block i+1
        # while normalizing block i) if DMA latency is still exposed on v7x.
        @pl.loop(0, T)
        def _issue(r):
            tok = ids_ref[base + r]
            pltpu.make_async_copy(
                tbl_hbm.at[pl.ds(tok, 1), :],
                gbuf.at[pl.ds(r, 1), :],
                sem.at[0],
            ).start()

        # Drain: every copy is (1, E_pad) of the same dtype, so T matching
        # waits on the shared semaphore balance the T completions.
        @pl.loop(0, T)
        def _drain(r):
            pltpu.make_async_copy(
                tbl_hbm.at[pl.ds(0, 1), :],
                gbuf.at[pl.ds(r, 1), :],
                sem.at[0],
            ).wait()

        emb = gbuf[...].astype(jnp.float32)
        inv = jax.lax.rsqrt(jnp.sum(emb * emb, axis=-1, keepdims=True))
        out_ref[...] = (emb * inv).astype(out_ref.dtype)

    return kernel


# ----------------------------------------------------------------------------
# Wrapper
# ----------------------------------------------------------------------------
def normalized_embedding_pallas(indices, table, *,
                                token_block: int = 256,
                                max_resident_table_bytes: int = 4 * 1024 * 1024):
    """indices: int array (...,); table: (vocab_size, n_embd) -> (..., n_embd)."""
    orig_shape = indices.shape
    V, E = table.shape
    dtype = table.dtype
    itemsize = table.dtype.itemsize

    # Flatten and clamp token ids (guards the HBM row DMA against OOB ids;
    # PyTorch would raise for such ids anyway).
    idx_flat = jnp.clip(indices.reshape(-1).astype(jnp.int32), 0, V - 1)
    N = idx_flat.shape[0]

    # Lane-dense embedding dim: pad E to a multiple of 128 with zero columns
    # (they contribute nothing to the row norm). Sliced off after the call.
    E_pad = _round_up(E, 128)
    table_p = jnp.pad(table, ((0, 0), (0, E_pad - E))) if E_pad != E else table

    # Token block: 256 fills the 256x256 MXU / amortizes per-step overhead,
    # capped by the sublane-aligned token count so tiny inputs aren't padded
    # to a huge block.
    T = min(token_block, _round_up(max(N, 8), 8))
    N_pad = _round_up(N, T)
    if N_pad != N:
        idx_flat = jnp.pad(idx_flat, (0, N_pad - N))        # pad id 0 (valid row)
    grid = (N_pad // T,)

    use_resident = (V * E_pad * itemsize <= max_resident_table_bytes
                    and V <= 4096)

    if use_resident:
        # --- Path A: keep the whole table VMEM-resident across the grid -----
        V_pad = _round_up(V, 128)
        if V_pad != V:
            table_p = jnp.pad(table_p, ((0, V_pad - V), (0, 0)))

        ws = (V_pad * E_pad * itemsize            # resident table
              + 2 * T * E_pad * itemsize          # double-buffered output
              + T * V_pad * 4                     # one-hot intermediate
              + 2 * T * 4)                        # id blocks
        vmem_limit = int(min(max(2 * ws, 32 * 1024 * 1024), 96 * 1024 * 1024))

        out = pl.pallas_call(
            _make_resident_kernel(T, V_pad),
            out_shape=jax.ShapeDtypeStruct((N_pad, E_pad), dtype),
            grid_spec=pltpu.PrefetchScalarGridSpec(
                num_scalar_prefetch=0,
                grid=grid,
                in_specs=[
                    pl.BlockSpec((T, 1), lambda i: (i, 0)),          # token ids
                    pl.BlockSpec((V_pad, E_pad), lambda i: (0, 0)),  # resident table
                ],
                out_specs=pl.BlockSpec((T, E_pad), lambda i: (i, 0)),
            ),
            compiler_params=pltpu.CompilerParams(
                dimension_semantics=("parallel",),
                vmem_limit_bytes=vmem_limit,
            ),
        )(idx_flat.reshape(N_pad, 1), table_p)
    else:
        # --- Path B: true row gather from HBM via manual batched DMA --------
        ws = (T * E_pad * itemsize                # gather buffer
              + 2 * T * E_pad * itemsize)         # double-buffered output
        vmem_limit = int(min(max(2 * ws, 32 * 1024 * 1024), 96 * 1024 * 1024))

        out = pl.pallas_call(
            _make_gather_kernel(T),
            out_shape=jax.ShapeDtypeStruct((N_pad, E_pad), dtype),
            grid_spec=pltpu.PrefetchScalarGridSpec(
                num_scalar_prefetch=1,                       # token ids -> SMEM
                grid=grid,
                in_specs=[pl.BlockSpec(memory_space=pl.ANY)],  # table stays in HBM
                out_specs=pl.BlockSpec((T, E_pad), lambda i, ids: (i, 0)),
                scratch_shapes=[
                    pltpu.VMEM((T, E_pad), dtype),
                    pltpu.SemaphoreType.DMA((1,)),
                ],
            ),
            compiler_params=pltpu.CompilerParams(
                dimension_semantics=("parallel",),
                vmem_limit_bytes=vmem_limit,
            ),
        )(idx_flat, table_p)

    return out[:N, :E].reshape(*orig_shape, E)


def normalized_embedding_ref(indices, table):
    """Plain-JAX reference mirroring the PyTorch forward."""
    e = table[indices]
    return e / jnp.linalg.norm(e, axis=-1, keepdims=True)


if __name__ == "__main__":
    key = jax.random.PRNGKey(0)
    k_tbl, k_idx, k_tbl2, k_idx2 = jax.random.split(key, 4)

    # --- Test 1: small shapes from the module (resident-table fast path) ----
    B, S, V, E = 2, 8, 128, 32
    table = jax.random.normal(k_tbl, (V, E), dtype=jnp.float32)
    x = jax.random.randint(k_idx, (B, S), 0, V, dtype=jnp.int32)

    out = jax.block_until_ready(normalized_embedding_pallas(x, table))
    ref = normalized_embedding_ref(x, table)
    assert out.shape == (B, S, E)
    assert jnp.allclose(out, ref, atol=1e-4, rtol=1e-4), "mismatch (resident path)"
    row_norms = jnp.linalg.norm(out, axis=-1)
    assert jnp.allclose(row_norms, jnp.ones_like(row_norms), atol=1e-4)

    # --- Test 2: force the large-vocab HBM row-gather path -------------------
    V2, E2 = 512, 96
    table2 = jax.random.normal(k_tbl2, (V2, E2), dtype=jnp.float32)
    x2 = jax.random.randint(k_idx2, (B, S), 0, V2, dtype=jnp.int32)
    out2 = jax.block_until_ready(
        normalized_embedding_pallas(x2, table2, max_resident_table_bytes=0))
    ref2 = normalized_embedding_ref(x2, table2)
    assert out2.shape == (B, S, E2)
    assert jnp.allclose(out2, ref2, atol=1e-4, rtol=1e-4), "mismatch (gather path)"

    print("KERNEL_OK")
</pallas_src>

<mosaic_0001>
module attributes {stable_mosaic.version = 11 : i64} {
  func.func @kernel(%arg0: i32, %arg1: memref<16x1xi32, #tpu.memory_space<vmem>>, %arg2: memref<128x128xf32, #tpu.memory_space<vmem>>, %arg3: memref<16x128xf32, #tpu.memory_space<vmem>>) attributes {dimension_semantics = [#tpu.dimension_semantics<parallel>], iteration_bounds = array<i64: 1>, scalar_prefetch = 0 : i64, scratch_operands = 0 : i64, tpu.core_type = #tpu.core_type<tc>, window_params = [{transform_indices = @transform_0, window_bounds = array<i64: 16, 1>}, {pipeline_mode = #tpu.pipeline_mode<synchronous>, transform_indices = @transform_1, window_bounds = array<i64: 128, 128>}, {transform_indices = @transform_2, window_bounds = array<i64: 16, 128>}]} {
    %c0 = arith.constant 0 : index
    %c0_0 = arith.constant 0 : index
    %0 = vector.load %arg1[%c0, %c0_0] : memref<16x1xi32, #tpu.memory_space<vmem>>, vector<16x1xi32>
    %1 = tpu.iota {dimensions = array<i32: 1>} : vector<16x128xi32>
    %2 = vector.broadcast %0 : vector<16x1xi32> to vector<16x128xi32>
    %3 = arith.cmpi eq, %1, %2 : vector<16x128xi32>
    %4 = arith.extui %3 : vector<16x128xi1> to vector<16x128xi32>
    %5 = arith.sitofp %4 : vector<16x128xi32> to vector<16x128xf32>
    %c0_1 = arith.constant 0 : index
    %c0_2 = arith.constant 0 : index
    %6 = vector.load %arg2[%c0_1, %c0_2] : memref<128x128xf32, #tpu.memory_space<vmem>>, vector<128x128xf32>
    %cst = arith.constant dense<0.000000e+00> : vector<16x128xf32>
    %7 = tpu.matmul %5, %6, %cst {dimension_numbers = #tpu.dot_dimension_numbers<[1], [0], [0], [1], [0, 0, 1, 1], [], []>} : vector<16x128xf32>, vector<128x128xf32>, vector<16x128xf32> -> vector<16x128xf32>
    %8 = arith.mulf %7, %7 : vector<16x128xf32>
    %cst_3 = arith.constant dense<0.000000e+00> : vector<16xf32>
    %9 = vector.multi_reduction <add>, %8, %cst_3 [1] : vector<16x128xf32> to vector<16xf32>
    %10 = vector.shape_cast %9 : vector<16xf32> to vector<16x1xf32>
    %11 = math.rsqrt %10 : vector<16x1xf32>
    %12 = vector.broadcast %11 : vector<16x1xf32> to vector<16x128xf32>
    %13 = arith.mulf %7, %12 : vector<16x128xf32>
    %c0_4 = arith.constant 0 : index
    %c0_5 = arith.constant 0 : index
    %14 = vector.load %arg3[%c0_4, %c0_5] : memref<16x128xf32, #tpu.memory_space<vmem>>, vector<16x128xf32>
    tpu.vector_store %arg3[%c0_4, %c0_5], %13 {strides = array<i32>} : memref<16x128xf32, #tpu.memory_space<vmem>>, vector<16x128xf32>,
    return
  }
  func.func @transform_0(%arg0: i32) -> (i32, i32) {
    %c0_i32 = arith.constant 0 : i32
    %c0_i32_0 = arith.constant 0 : i32
    return %arg0, %c0_i32 : i32, i32
  }
  func.func @transform_1(%arg0: i32) -> (i32, i32) {
    %c0_i32 = arith.constant 0 : i32
    %c0_i32_0 = arith.constant 0 : i32
    %c0_i32_1 = arith.constant 0 : i32
    return %c0_i32, %c0_i32_0 : i32, i32
  }
  func.func @transform_2(%arg0: i32) -> (i32, i32) {
    %c0_i32 = arith.constant 0 : i32
    %c0_i32_0 = arith.constant 0 : i32
    return %arg0, %c0_i32 : i32, i32
  }
}

</mosaic_0001>

<llo_original>
// kernel: tpu_custom_call.1
$region0: #{tpu_custom_call.1}
  #allocation0 [shape = 'u32[]', space=smem, size = 0x4, offset = 0x4, fixed_abs, tag = 'smem constant byte address 0x4 - core index']
  #allocation1 [shape = 'u32[144,128]{1,0:T(1,128)}', space=vmem, size = 0x12000, scoped, tag = 'internal scratch']
  %s0 = inlined_call_operand.vmem [shape: s32[16,1], index: 0, kind: input, shape index: {}]
  %s1 = inlined_call_operand.hbm [shape: f32[128,128], index: 1, kind: input, shape index: {}]
  %s2 = inlined_call_operand.hbm [shape: f32[16,128], index: 2, kind: output, shape index: {}]
  %s3 = sld [smem:[#allocation0]]
  $region22: #{tpu_custom_call.1} parent=0
    _
  %s5 = ssub.s32 1, %s3
  %s6 = scalar_select 0, %s5, %s3
  $region1: #{tpu_custom_call.1} parent=0
    #allocation2 [shape = 'u8[65536]{0}', space=vmem, size = 0x10000, scoped, tag = 'input window, operand 1, single buffered']
    #allocation3 [shape = 's32[1]{0}', space=sflag, size = 0x4, scoped, tag = 'scoped memory for tpu_custom_call.1']
    #allocation4 [shape = 's32[1]{0}', space=sflag, size = 0x4, scoped, tag = 'scoped memory for tpu_custom_call.1']
    #allocation5 [shape = 'u8[8192]{0}', space=vmem, size = 0x2000, scoped, tag = 'output window, operand 0, single buffered']
    %7 = vsyncpa [#allocation3], 0
    %8 = vsyncpa [#allocation4], 0
    // Predicated region
    $region2: #{tpu_custom_call.1} parent=1 // pred_check
      _
    $region3: #{tpu_custom_call.1} parent=1 // pred_check_branch
      %10 = sbr.rel (0) target = $region5
    $region4: #{tpu_custom_call.1} parent=1 // pred_region
      _
    $region5: #{tpu_custom_call.1} parent=1 // pred_fallthru
      _
    // Predicated region
    $region6: #{tpu_custom_call.1} parent=1 // pred_check
      _
    $region7: #{tpu_custom_call.1} parent=1 // pred_check_branch
      %12 = sbr.rel (0) target = $region9
    $region8: #{tpu_custom_call.1} parent=1 // pred_region
      %s14 = ssub.s32 2048, 2048
      %15 = vsyncadd [#allocation3], %s14
      %s16 = sshll.u32 [#allocation2], 4
      %s17 = int_to_ptr.vmem [resolvable:$true] %s16
      %22 = dma.hbm_to_vmem [thread:$0]  %s1, 2048, %s17, [#allocation3], 128, 128, 8
    $region9: #{tpu_custom_call.1} parent=1 // pred_fallthru
      _
    // Predicated region
    $region10: #{tpu_custom_call.1} parent=1 // pred_check
      _
    $region11: #{tpu_custom_call.1} parent=1 // pred_check_branch
      %24 = sbr.rel (0) target = $region13
    $region12: #{tpu_custom_call.1} parent=1 // pred_region
      %25 = dma.done [#allocation3], 2048
    $region13: #{tpu_custom_call.1} parent=1 // pred_fallthru
      _
    %v26 = vld [vmem:[%s0] sm:$0xff]
    %v27 = vld [vmem:[%s0 + $0x8] sm:$0xff]
    %v28 = vlaneseq
    %v29 = vand.u32 %v28, 127
    %30 = vset.pattern.permute.xlu0 0
    %31 = vperm.xlu0 %30, %v26
    %v32 = vpop.permute.xlu0 %31
    %33 = vset.pattern.permute.xlu0 0
    %34 = vperm.xlu0 %33, %v27
    %v35 = vpop.permute.xlu0 %34
    %vm36 = vcmp.eq.s32.totalorder %v29, %v32
    %vm37 = vcmp.eq.s32.totalorder %v29, %v35
    %v38 = vsel %vm36, 1, 0
    %v39 = vsel %vm37, 1, 0
    %v40 = vcvt.s32.f32 %v38
    %v41 = vcvt.s32.f32 %v39
    %v42 = vld [vmem:[#allocation2] sm:$0xff]
    %v43 = vld [vmem:[#allocation2 + $0x8] sm:$0xff]
    %v44 = vld [vmem:[#allocation2 + $0x10] sm:$0xff]
    %v45 = vld [vmem:[#allocation2 + $0x18] sm:$0xff]
    %v46 = vld [vmem:[#allocation2 + $0x20] sm:$0xff]
    %v47 = vld [vmem:[#allocation2 + $0x28] sm:$0xff]
    %v48 = vld [vmem:[#allocation2 + $0x30] sm:$0xff]
    %v49 = vld [vmem:[#allocation2 + $0x38] sm:$0xff]
    %v50 = vld [vmem:[#allocation2 + $0x40] sm:$0xff]
    %v51 = vld [vmem:[#allocation2 + $0x48] sm:$0xff]
    %v52 = vld [vmem:[#allocation2 + $0x50] sm:$0xff]
    %v53 = vld [vmem:[#allocation2 + $0x58] sm:$0xff]
    %v54 = vld [vmem:[#allocation2 + $0x60] sm:$0xff]
    %v55 = vld [vmem:[#allocation2 + $0x68] sm:$0xff]
    %v56 = vld [vmem:[#allocation2 + $0x70] sm:$0xff]
    %v57 = vld [vmem:[#allocation2 + $0x78] sm:$0xff]
    %58 = vmatprep.subr.mxu0 0.0
    %59 = vmatpush1.msra.mxu0 %v42
    %60 = vmatprep.subr.mxu0 0.0
    %61 = vmatpush1.msra.mxu0 %v43
    %62 = vmatprep.subr.mxu0 0.0
    %63 = vmatpush1.msra.mxu0 %v44
    %64 = vmatprep.subr.mxu0 0.0
    %65 = vmatpush1.msra.mxu0 %v45
    %66 = vmatprep.subr.mxu0 0.0
    %67 = vmatpush1.msra.mxu0 %v46
    %68 = vmatprep.subr.mxu0 0.0
    %69 = vmatpush1.msra.mxu0 %v47
    %70 = vmatprep.subr.mxu0 0.0
    %71 = vmatpush1.msra.mxu0 %v48
    %72 = vmatprep.subr.mxu0 0.0
    %73 = vmatpush1.msra.mxu0 %v49
    %74 = vmatprep.subr.mxu0 0.0
    %75 = vmatpush1.msra.mxu0 %v50
    %76 = vmatprep.subr.mxu0 0.0
    %77 = vmatpush1.msra.mxu0 %v51
    %78 = vmatprep.subr.mxu0 0.0
    %79 = vmatpush1.msra.mxu0 %v52
    %80 = vmatprep.subr.mxu0 0.0
    %81 = vmatpush1.msra.mxu0 %v53
    %82 = vmatprep.subr.mxu0 0.0
    %83 = vmatpush1.msra.mxu0 %v54
    %84 = vmatprep.subr.mxu0 0.0
    %85 = vmatpush1.msra.mxu0 %v55
    %86 = vmatprep.subr.mxu0 0.0
    %87 = vmatpush1.msra.mxu0 %v56
    %88 = vmatprep.subr.mxu0 0.0
    %89 = vmatpush1.msra.mxu0 %v57
    %90 = vmatprep.subr.mxu0 0.0
    %91 = vmatpush1.msra.mxu0 0.0
    %92 = vmatprep.subr.mxu0 0.0
    %93 = vmatpush1.msra.mxu0 0.0
    %94 = vmatprep.subr.mxu0 0.0
    %95 = vmatpush1.msra.mxu0 0.0
    %96 = vmatprep.subr.mxu0 0.0
    %97 = vmatpush1.msra.mxu0 0.0
    %98 = vmatprep.subr.mxu0 0.0
    %99 = vmatpush1.msra.mxu0 0.0
    %100 = vmatprep.subr.mxu0 0.0
    %101 = vmatpush1.msra.mxu0 0.0
    %102 = vmatprep.subr.mxu0 0.0
    %103 = vmatpush1.msra.mxu0 0.0
    %104 = vmatprep.subr.mxu0 0.0
    %105 = vmatpush1.msra.mxu0 0.0
    %106 = vmatprep.subr.mxu0 0.0
    %107 = vmatpush1.msra.mxu0 0.0
    %108 = vmatprep.subr.mxu0 0.0
    %109 = vmatpush1.msra.mxu0 0.0
    %110 = vmatprep.subr.mxu0 0.0
    %111 = vmatpush1.msra.mxu0 0.0
    %112 = vmatprep.subr.mxu0 0.0
    %113 = vmatpush1.msra.mxu0 0.0
    %114 = vmatprep.subr.mxu0 0.0
    %115 = vmatpush1.msra.mxu0 0.0
    %116 = vmatprep.subr.mxu0 0.0
    %117 = vmatpush1.msra.mxu0 0.0
    %118 = vmatprep.subr.mxu0 0.0
    %119 = vmatpush1.msra.mxu0 0.0
    %120 = vmatprep.subr.mxu0 0.0
    %121 = vmatpush1.msra.mxu0 0.0
    %122 = vmatprep.mubr.f32.mxu0 0.0
    %123 = vmatmul.mubr.f32.gmra.mrb[0].mxu0 %v40
    %v124 = vpop.f32.mrb[0].mxu0
    %v125 = vadd.f32 0.0, %v124
    %v126 = vpop.f32.mrb[0].mxu0
    %127 = vmatprep.mubr.f32.mxu0 0.0
    %128 = vmatmul.mubr.f32.gmra.mrb[0].mxu0 %v41
    %v129 = vpop.f32.mrb[0].mxu0
    %v130 = vadd.f32 0.0, %v129
    %v131 = vpop.f32.mrb[0].mxu0
    %132 = vdwg.mxu0
    %v133 = vmul.f32 %v125, %v125
    %v134 = vmul.f32 %v130, %v130
    %135 = vadd.xlane.f32.xlu0 %v133
    %v136 = vpop.xlane.xlu0 %135
    %137 = vadd.xlane.f32.xlu0 %v134
    %v138 = vpop.xlane.xlu0 %137
    %v139 = vrsqrt.pop %v136
    %v140 = vrsqrt.pop %v138
    %v141 = vmul.f32 %v125, %v139
    %v142 = vmul.f32 %v130, %v140
    %143 = vst [vmem:[#allocation5] sm:$0xff] %v141
    %144 = vst [vmem:[#allocation5 + $0x8] sm:$0xff] %v142
    // Predicated region
    $region14: #{tpu_custom_call.1} parent=1 // pred_check
      _
    $region15: #{tpu_custom_call.1} parent=1 // pred_check_branch
      %146 = sbr.rel (0) target = $region17
    $region16: #{tpu_custom_call.1} parent=1 // pred_region
      %s148 = ssub.s32 256, 256
      %149 = vsyncadd [#allocation4], %s148
      %s150 = sshll.u32 [#allocation5], 4
      %s151 = int_to_ptr.vmem [resolvable:$true] %s150
      %156 = dma.vmem_to_hbm [thread:$0]  %s151, 256, %s2, [#allocation4], 128, 128, 8
    $region17: #{tpu_custom_call.1} parent=1 // pred_fallthru
      _
    // Predicated region
    $region18: #{tpu_custom_call.1} parent=1 // pred_check
      _
    $region19: #{tpu_custom_call.1} parent=1 // pred_check_branch
      %158 = sbr.rel (0) target = $region21
    $region20: #{tpu_custom_call.1} parent=1 // pred_region
      %159 = dma.done [#allocation4], 256
    $region21: #{tpu_custom_call.1} parent=1 // pred_fallthru
      _
    %160 = vsyncpa [#allocation3], 1
    %161 = vsyncpa [#allocation4], 1

</llo_original>
